<compile_context>
chip_gen: v7x
topology: tpu7x:2x2x1
jax: 0.10.0
libtpu: 0.0.40
codegen_flags: <defaults>
</compile_context>

<pallas_src>
import jax
import jax.numpy as jnp
from jax.experimental import pallas as pl
from jax.experimental.pallas import tpu as pltpu


def _round_up(x, m):
    return (x + m - 1) // m * m


# ----------------------------- kernel body ---------------------------------

def highway_kernel(x_ref, w_ref, b_ref, o_ref):
    d = o_ref.shape[-1]                     # padded feature size (multiple of 128)
    x = x_ref[...]
    # One fused (tm, d) @ (d, 2d) MXU matmul covering both branches.
    # Operands in the stored weight dtype (bf16 by default), f32 accumulation.
    y = jnp.dot(x.astype(w_ref.dtype), w_ref[...],
                preferred_element_type=jnp.float32) + b_ref[...]
    xf = x.astype(jnp.float32)
    h = jnp.maximum(y[:, :d], 0.0)          # H branch: ReLU
    t = jax.nn.sigmoid(y[:, d:])            # T branch: gate
    # Highway combine: h*t + x*(1-t) == x + t*(h - x)   (one vmul fewer)
    o_ref[...] = (xf + t * (h - xf)).astype(o_ref.dtype)


# ----------------------- one-time parameter prep ---------------------------

def prepare_highway_params(wh, bh, wt, bt, *, matmul_dtype=jnp.bfloat16):
    """Fuse + pad the Highway parameters once (call outside the hot path).

    wh, wt : (D, D) stored as (in, out)  (i.e. torch weight.T)
    bh, bt : (D,) or (1, D)
    Returns (w_fused, b_fused): (d_pad, 2*d_pad) weight in `matmul_dtype`,
    (1, 2*d_pad) float32 bias.  Padded bias columns are 0 so padded outputs
    stay exactly 0 (keep this invariant if fusing offline).
    """
    D = wh.shape[0]
    assert wh.shape == (D, D) and wt.shape == (D, D), "highway needs in_size == out_size"
    bh = jnp.asarray(bh, jnp.float32).reshape(1, -1)
    bt = jnp.asarray(bt, jnp.float32).reshape(1, -1)

    d_pad = _round_up(D, 128)
    pad = d_pad - D
    if pad:
        wh = jnp.pad(wh, ((0, pad), (0, pad)))
        wt = jnp.pad(wt, ((0, pad), (0, pad)))
        bh = jnp.pad(bh, ((0, 0), (0, pad)))
        bt = jnp.pad(bt, ((0, 0), (0, pad)))

    w = jnp.concatenate([wh, wt], axis=1).astype(matmul_dtype)   # (d_pad, 2*d_pad)
    b = jnp.concatenate([bh, bt], axis=1).astype(jnp.float32)    # (1, 2*d_pad)
    return w, b


# ------------------------------- wrapper ------------------------------------

def highway(x, w_fused, b_fused, *, tm_max=512, min_tiles=2, unpad_output=True):
    """Highway forward with pre-fused params.

    x        : (B, D) activations (D is the *unpadded* feature size)
    w_fused  : (d_pad, 2*d_pad) from prepare_highway_params
    b_fused  : (1, 2*d_pad) float32
    tm_max   : max rows per grid step
    min_tiles: minimum grid steps for B >= 16 (pipelining / v7x dual-TC)
    """
    B, D = x.shape
    d_pad, two_d = w_fused.shape
    assert two_d == 2 * d_pad and b_fused.shape == (1, two_d)
    pad = d_pad - D
    assert pad >= 0, "x feature dim larger than prepared params"

    x_in = jnp.pad(x, ((0, 0), (0, pad))) if pad else x

    # Balanced batch tiles; >= min_tiles grid steps once B >= 16.
    if B >= 16:
        n_tiles = max(min_tiles, pl.cdiv(B, tm_max))
        tm = min(_round_up(pl.cdiv(B, n_tiles), 8), _round_up(B, 8))
    else:
        tm = B                                  # single tile == full batch dim
    grid = (pl.cdiv(B, tm),)

    # Explicit VMEM budget: x/out double-buffered, weight single-buffered,
    # f32 matmul intermediate + elementwise temporaries, plus headroom.
    xb = jnp.dtype(x.dtype).itemsize
    wb = jnp.dtype(w_fused.dtype).itemsize
    est = (2 * tm * d_pad * xb                  # x tile, double-buffered
           + 2 * tm * d_pad * xb                # out tile, double-buffered
           + d_pad * two_d * wb                 # fused weight (Buffered(1))
           + two_d * 4                          # bias
           + tm * two_d * 4                     # f32 matmul result
           + 3 * tm * d_pad * 4)                # h / t / combine temporaries
    vmem_limit = int(min(max(est * 3 // 2 + (4 << 20), 16 << 20), 64 << 20))

    cost = pl.CostEstimate(
        flops=2 * B * d_pad * two_d + 6 * B * d_pad,
        transcendentals=B * d_pad,                               # sigmoid
        bytes_accessed=(x_in.size * xb + w_fused.size * wb
                        + b_fused.size * 4 + B * d_pad * xb),
    )

    out = pl.pallas_call(
        highway_kernel,
        out_shape=jax.ShapeDtypeStruct((B, d_pad), x.dtype),
        grid=grid,
        in_specs=[
            # x: tiled over the batch; software-pipelined by Pallas.
            pl.BlockSpec((tm, d_pad), lambda i: (i, 0)),
            # fused weight / bias: constant index_map -> fetched once, resident
            # in VMEM for the whole grid; single-buffered to halve VMEM use.
            pl.BlockSpec((d_pad, two_d), lambda i: (0, 0),
                         pipeline_mode=pl.Buffered(1)),
            pl.BlockSpec((1, two_d), lambda i: (0, 0),
                         pipeline_mode=pl.Buffered(1)),
        ],
        out_specs=pl.BlockSpec((tm, d_pad), lambda i: (i, 0)),
        compiler_params=pltpu.CompilerParams(
            dimension_semantics=("parallel",),      # shard batch tiles on v7x
            vmem_limit_bytes=vmem_limit,
        ),
        cost_estimate=cost,
    )(x_in, w_fused, b_fused)

    if pad and unpad_output:
        # NOTE: this slice is an extra HBM pass; downstream consumers that can
        # take the padded width should pass unpad_output=False.
        return out[:, :D]
    return out


# ------------------------------ reference -----------------------------------

def highway_reference(x, wh, bh, wt, bt):
    hp = jax.lax.Precision.HIGHEST
    h = jnp.maximum(jnp.dot(x, wh, precision=hp) + bh.reshape(1, -1), 0.0)
    t = jax.nn.sigmoid(jnp.dot(x, wt, precision=hp) + bt.reshape(1, -1))
    return h * t + x * (1.0 - t)


def _make_params(key, in_size, out_size):
    kwh, kwt = jax.random.split(key, 2)
    bound = 1.0 / (in_size ** 0.5)
    # Stored as (in, out) == torch weight (out, in) transposed.
    wh = jax.random.uniform(kwh, (in_size, out_size), jnp.float32, -bound, bound)
    wt = jax.random.uniform(kwt, (in_size, out_size), jnp.float32, -bound, bound)
    bh = jnp.zeros((1, out_size), dtype=jnp.float32)        # H.bias.data.zero_()
    bt = jnp.full((1, out_size), -1.0, dtype=jnp.float32)   # T.bias.data.fill_(-1)
    return wh, bh, wt, bt


if __name__ == "__main__":
    key = jax.random.PRNGKey(0)
    k1, k2, k3, k4 = jax.random.split(key, 4)

    # ---- Test 1: small module-like shape (exercises feature padding), bf16 MXU path ----
    batch, in_size = 8, 32
    x = jax.random.normal(k1, (batch, in_size), dtype=jnp.float32)
    wh, bh, wt, bt = _make_params(k2, in_size, in_size)
    w_f, b_f = prepare_highway_params(wh, bh, wt, bt)                 # bf16 weight (default)
    y = jax.block_until_ready(highway(x, w_f, b_f))
    y_ref = highway_reference(x, wh, bh, wt, bt)
    assert y.shape == y_ref.shape
    assert jnp.allclose(y, y_ref, atol=2e-2, rtol=2e-2), "mismatch vs reference (bf16 path)"

    # ---- Test 2: lane-aligned D, balanced 2-step grid, f32 MXU path ----
    batch2, d2 = 300, 128
    x2 = jax.random.normal(k3, (batch2, d2), dtype=jnp.float32)
    wh2, bh2, wt2, bt2 = _make_params(k4, d2, d2)
    w2_f, b2_f = prepare_highway_params(wh2, bh2, wt2, bt2, matmul_dtype=jnp.float32)
    y2 = jax.block_until_ready(highway(x2, w2_f, b2_f))               # grid=(2,), tiles 152+148
    y2_ref = highway_reference(x2, wh2, bh2, wt2, bt2)
    assert y2.shape == y2_ref.shape
    assert jnp.allclose(y2, y2_ref, atol=1e-3, rtol=1e-3), "mismatch vs reference (f32 path)"

    print("KERNEL_OK")
</pallas_src>

<mosaic_0001>
module attributes {stable_mosaic.version = 11 : i64} {
  func.func @highway_kernel(%arg0: i32, %arg1: memref<8x128xf32, #tpu.memory_space<vmem>>, %arg2: memref<128x256xbf16, #tpu.memory_space<vmem>>, %arg3: memref<1x256xf32, #tpu.memory_space<vmem>>, %arg4: memref<8x128xf32, #tpu.memory_space<vmem>>) attributes {dimension_semantics = [#tpu.dimension_semantics<parallel>], iteration_bounds = array<i64: 1>, scalar_prefetch = 0 : i64, scratch_operands = 0 : i64, tpu.core_type = #tpu.core_type<tc>, window_params = [{transform_indices = @transform_0, window_bounds = array<i64: 8, 128>}, {pipeline_mode = #tpu.pipeline_mode<synchronous>, transform_indices = @transform_1, window_bounds = array<i64: 128, 256>}, {pipeline_mode = #tpu.pipeline_mode<synchronous>, transform_indices = @transform_2, window_bounds = array<i64: 1, 256>}, {transform_indices = @transform_3, window_bounds = array<i64: 8, 128>}]} {
    %c0 = arith.constant 0 : index
    %c0_0 = arith.constant 0 : index
    %0 = vector.load %arg1[%c0, %c0_0] : memref<8x128xf32, #tpu.memory_space<vmem>>, vector<8x128xf32>
    %1 = arith.truncf %0 : vector<8x128xf32> to vector<8x128xbf16>
    %c0_1 = arith.constant 0 : index
    %c0_2 = arith.constant 0 : index
    %2 = vector.load %arg2[%c0_1, %c0_2] : memref<128x256xbf16, #tpu.memory_space<vmem>>, vector<128x256xbf16>
    %cst = arith.constant dense<0.000000e+00> : vector<8x256xf32>
    %3 = tpu.matmul %1, %2, %cst {dimension_numbers = #tpu.dot_dimension_numbers<[1], [0], [0], [1], [0, 0, 1, 1], [], []>} : vector<8x128xbf16>, vector<128x256xbf16>, vector<8x256xf32> -> vector<8x256xf32>
    %c0_3 = arith.constant 0 : index
    %c0_4 = arith.constant 0 : index
    %4 = vector.load %arg3[%c0_3, %c0_4] : memref<1x256xf32, #tpu.memory_space<vmem>>, vector<1x256xf32>
    %5 = vector.broadcast %4 : vector<1x256xf32> to vector<8x256xf32>
    %6 = arith.addf %3, %5 : vector<8x256xf32>
    %7 = vector.extract_strided_slice %6 {offsets = [0, 0], sizes = [8, 128], strides = [1, 1]} : vector<8x256xf32> to vector<8x128xf32>
    %cst_5 = arith.constant 0.000000e+00 : f32
    %8 = vector.broadcast %cst_5 : f32 to vector<8x128xf32>
    %9 = arith.maximumf %7, %8 : vector<8x128xf32>
    %10 = vector.extract_strided_slice %6 {offsets = [0, 128], sizes = [8, 128], strides = [1, 1]} : vector<8x256xf32> to vector<8x128xf32>
    %11 = arith.negf %10 : vector<8x128xf32>
    %12 = math.exp %11 : vector<8x128xf32>
    %cst_6 = arith.constant 1.000000e+00 : f32
    %13 = vector.broadcast %cst_6 : f32 to vector<8x128xf32>
    %14 = arith.addf %13, %12 : vector<8x128xf32>
    %15 = arith.divf %13, %14 : vector<8x128xf32>
    %16 = arith.subf %9, %0 : vector<8x128xf32>
    %17 = arith.mulf %15, %16 : vector<8x128xf32>
    %18 = arith.addf %0, %17 : vector<8x128xf32>
    %c0_7 = arith.constant 0 : index
    %c0_8 = arith.constant 0 : index
    %19 = vector.load %arg4[%c0_7, %c0_8] : memref<8x128xf32, #tpu.memory_space<vmem>>, vector<8x128xf32>
    tpu.vector_store %arg4[%c0_7, %c0_8], %18 {strides = array<i32>} : memref<8x128xf32, #tpu.memory_space<vmem>>, vector<8x128xf32>,
    return
  }
  func.func @transform_0(%arg0: i32) -> (i32, i32) {
    %c0_i32 = arith.constant 0 : i32
    %c0_i32_0 = arith.constant 0 : i32
    return %arg0, %c0_i32 : i32, i32
  }
  func.func @transform_1(%arg0: i32) -> (i32, i32) {
    %c0_i32 = arith.constant 0 : i32
    %c0_i32_0 = arith.constant 0 : i32
    %c0_i32_1 = arith.constant 0 : i32
    return %c0_i32, %c0_i32_0 : i32, i32
  }
  func.func @transform_2(%arg0: i32) -> (i32, i32) {
    %c0_i32 = arith.constant 0 : i32
    %c0_i32_0 = arith.constant 0 : i32
    %c0_i32_1 = arith.constant 0 : i32
    return %c0_i32, %c0_i32_0 : i32, i32
  }
  func.func @transform_3(%arg0: i32) -> (i32, i32) {
    %c0_i32 = arith.constant 0 : i32
    %c0_i32_0 = arith.constant 0 : i32
    return %arg0, %c0_i32 : i32, i32
  }
}

</mosaic_0001>

<llo_original>
// kernel: tpu_custom_call.1
$region0: #{tpu_custom_call.1}
  #allocation0 [shape = 'u32[]', space=smem, size = 0x4, offset = 0x4, fixed_abs, tag = 'smem constant byte address 0x4 - core index']
  #allocation1 [shape = 'u32[144,128]{1,0:T(1,128)}', space=vmem, size = 0x12000, scoped, tag = 'internal scratch']
  %s0 = inlined_call_operand.hbm [shape: f32[8,128], index: 0, kind: input, shape index: {}]
  %s1 = inlined_call_operand.hbm [shape: bf16[128,256], index: 1, kind: input, shape index: {}]
  %s2 = inlined_call_operand.vmem [shape: f32[1,256], index: 2, kind: input, shape index: {}]
  %s3 = inlined_call_operand.hbm [shape: f32[8,128], index: 3, kind: output, shape index: {}]
  %s4 = sld [smem:[#allocation0]]
  $region30: #{tpu_custom_call.1} parent=0
    _
  %s6 = ssub.s32 1, %s4
  %s7 = scalar_select 0, %s6, %s4
  $region1: #{tpu_custom_call.1} parent=0
    #allocation2 [shape = 'u8[4096]{0}', space=vmem, size = 0x1000, scoped, tag = 'input window, operand 0, single buffered']
    #allocation3 [shape = 's32[1]{0}', space=sflag, size = 0x4, scoped, tag = 'scoped memory for tpu_custom_call.1']
    #allocation4 [shape = 's32[1]{0}', space=sflag, size = 0x4, scoped, tag = 'scoped memory for tpu_custom_call.1']
    #allocation5 [shape = 'u8[65536]{0}', space=vmem, size = 0x10000, scoped, tag = 'input window, operand 1, single buffered']
    #allocation6 [shape = 's32[1]{0}', space=sflag, size = 0x4, scoped, tag = 'scoped memory for tpu_custom_call.1']
    #allocation7 [shape = 'u8[4096]{0}', space=vmem, size = 0x1000, scoped, tag = 'output window, operand 0, single buffered']
    %8 = vsyncpa [#allocation3], 0
    %9 = vsyncpa [#allocation6], 0
    %10 = vsyncpa [#allocation4], 0
    // Predicated region
    $region2: #{tpu_custom_call.1} parent=1 // pred_check
      _
    $region3: #{tpu_custom_call.1} parent=1 // pred_check_branch
      %12 = sbr.rel (0) target = $region5
    $region4: #{tpu_custom_call.1} parent=1 // pred_region
      %s14 = ssub.s32 128, 128
      %15 = vsyncadd [#allocation3], %s14
      %s17 = sshll.u32 [#allocation2], 4
      %s18 = int_to_ptr.vmem [resolvable:$true] %s17
      %20 = dma.hbm_to_vmem [thread:$0]  %s0, 128, %s18, [#allocation3]
    $region5: #{tpu_custom_call.1} parent=1 // pred_fallthru
      _
    // Predicated region
    $region6: #{tpu_custom_call.1} parent=1 // pred_check
      _
    $region7: #{tpu_custom_call.1} parent=1 // pred_check_branch
      %22 = sbr.rel (0) target = $region9
    $region8: #{tpu_custom_call.1} parent=1 // pred_region
      %s24 = ssub.s32 2048, 2048
      %25 = vsyncadd [#allocation6], %s24
      %s26 = sshll.u32 [#allocation5], 4
      %s27 = int_to_ptr.vmem [resolvable:$true] %s26
      %32 = dma.hbm_to_vmem [thread:$0]  %s1, 2048, %s27, [#allocation6], 128, 128, 8
    $region9: #{tpu_custom_call.1} parent=1 // pred_fallthru
      _
    // Predicated region
    $region10: #{tpu_custom_call.1} parent=1 // pred_check
      _
    $region11: #{tpu_custom_call.1} parent=1 // pred_check_branch
      %34 = sbr.rel (0) target = $region13
    $region12: #{tpu_custom_call.1} parent=1 // pred_region
      _
    $region13: #{tpu_custom_call.1} parent=1 // pred_fallthru
      _
    // Predicated region
    $region14: #{tpu_custom_call.1} parent=1 // pred_check
      _
    $region15: #{tpu_custom_call.1} parent=1 // pred_check_branch
      %36 = sbr.rel (0) target = $region17
    $region16: #{tpu_custom_call.1} parent=1 // pred_region
      %37 = dma.done [#allocation3], 128
    $region17: #{tpu_custom_call.1} parent=1 // pred_fallthru
      _
    // Predicated region
    $region18: #{tpu_custom_call.1} parent=1 // pred_check
      _
    $region19: #{tpu_custom_call.1} parent=1 // pred_check_branch
      %39 = sbr.rel (0) target = $region21
    $region20: #{tpu_custom_call.1} parent=1 // pred_region
      %40 = dma.done [#allocation6], 2048
    $region21: #{tpu_custom_call.1} parent=1 // pred_fallthru
      _
    %v42 = vld [vmem:[#allocation2] sm:$0xff]
    %v43 = vpack.c.bf16 %v42, %v42
    %v44 = vld [vmem:[#allocation5] sm:$0xff]
    %v45 = vld [vmem:[#allocation5 + $0x8] sm:$0xff]
    %v46 = vld [vmem:[#allocation5 + $0x10] sm:$0xff]
    %v47 = vld [vmem:[#allocation5 + $0x18] sm:$0xff]
    %v48 = vld [vmem:[#allocation5 + $0x20] sm:$0xff]
    %v49 = vld [vmem:[#allocation5 + $0x28] sm:$0xff]
    %v50 = vld [vmem:[#allocation5 + $0x30] sm:$0xff]
    %v51 = vld [vmem:[#allocation5 + $0x38] sm:$0xff]
    %v52 = vld [vmem:[#allocation5 + $0x40] sm:$0xff]
    %v53 = vld [vmem:[#allocation5 + $0x48] sm:$0xff]
    %v54 = vld [vmem:[#allocation5 + $0x50] sm:$0xff]
    %v55 = vld [vmem:[#allocation5 + $0x58] sm:$0xff]
    %v56 = vld [vmem:[#allocation5 + $0x60] sm:$0xff]
    %v57 = vld [vmem:[#allocation5 + $0x68] sm:$0xff]
    %v58 = vld [vmem:[#allocation5 + $0x70] sm:$0xff]
    %v59 = vld [vmem:[#allocation5 + $0x78] sm:$0xff]
    %v60 = vld [vmem:[%s2] sm:$0x3]
    %v62 = vlaneseq
    %v63 = vshrl.u32 %v62, 7
    %v64 = vsub.s32 0, %v63
    %v65 = vrot.slane %v60, %v64
    %v66 = vlaneseq
    %v67 = vshrl.u32 %v66, 7
    %v68 = vsub.s32 1, %v67
    %v69 = vrot.slane %v60, %v68
    %v88 = vunpack.c.l.b16 %v44
    %v89 = vunpack.c.h.b16 %v44
    %v90 = vunpack.c.l.b16 %v45
    %v91 = vunpack.c.h.b16 %v45
    %v92 = vunpack.c.l.b16 %v46
    %v93 = vunpack.c.h.b16 %v46
    %v94 = vunpack.c.l.b16 %v47
    %v95 = vunpack.c.h.b16 %v47
    %v96 = vunpack.c.l.b16 %v48
    %v97 = vunpack.c.h.b16 %v48
    %v98 = vunpack.c.l.b16 %v49
    %v99 = vunpack.c.h.b16 %v49
    %v100 = vunpack.c.l.b16 %v50
    %v101 = vunpack.c.h.b16 %v50
    %v102 = vunpack.c.l.b16 %v51
    %v103 = vunpack.c.h.b16 %v51
    %v104 = vunpack.c.l.b16 %v52
    %v105 = vunpack.c.h.b16 %v52
    %v106 = vunpack.c.l.b16 %v53
    %v107 = vunpack.c.h.b16 %v53
    %v108 = vunpack.c.l.b16 %v54
    %v109 = vunpack.c.h.b16 %v54
    %v110 = vunpack.c.l.b16 %v55
    %v111 = vunpack.c.h.b16 %v55
    %v112 = vunpack.c.l.b16 %v56
    %v113 = vunpack.c.h.b16 %v56
    %v114 = vunpack.c.l.b16 %v57
    %v115 = vunpack.c.h.b16 %v57
    %v116 = vunpack.c.l.b16 %v58
    %v117 = vunpack.c.h.b16 %v58
    %v118 = vunpack.c.l.b16 %v59
    %v119 = vunpack.c.h.b16 %v59
    %v120 = vpack.c.b16 %v90, %v88
    %v121 = vpack.c.b16 %v91, %v89
    %v122 = vpack.c.b16 %v94, %v92
    %v123 = vpack.c.b16 %v95, %v93
    %v124 = vpack.c.b16 %v98, %v96
    %v125 = vpack.c.b16 %v99, %v97
    %v126 = vpack.c.b16 %v102, %v100
    %v127 = vpack.c.b16 %v103, %v101
    %v128 = vpack.c.b16 %v106, %v104
    %v129 = vpack.c.b16 %v107, %v105
    %v130 = vpack.c.b16 %v110, %v108
    %v131 = vpack.c.b16 %v111, %v109
    %v132 = vpack.c.b16 %v114, %v112
    %v133 = vpack.c.b16 %v115, %v113
    %v134 = vpack.c.b16 %v118, %v116
    %v135 = vpack.c.b16 %v119, %v117
    %152 = vmatprep.subr.bf16.mxu0 %v121
    %153 = vmatpush1.bf16.msra.mxu0 %v120
    %154 = vmatprep.subr.bf16.mxu0 %v123
    %155 = vmatpush1.bf16.msra.mxu0 %v122
    %156 = vmatprep.subr.bf16.mxu0 %v125
    %157 = vmatpush1.bf16.msra.mxu0 %v124
    %158 = vmatprep.subr.bf16.mxu0 %v127
    %159 = vmatpush1.bf16.msra.mxu0 %v126
    %160 = vmatprep.subr.bf16.mxu0 %v129
    %161 = vmatpush1.bf16.msra.mxu0 %v128
    %162 = vmatprep.subr.bf16.mxu0 %v131
    %163 = vmatpush1.bf16.msra.mxu0 %v130
    %164 = vmatprep.subr.bf16.mxu0 %v133
    %165 = vmatpush1.bf16.msra.mxu0 %v132
    %166 = vmatprep.subr.bf16.mxu0 %v135
    %167 = vmatpush1.bf16.msra.mxu0 %v134
    %168 = vmatprep.subr.bf16.mxu0 0
    %169 = vmatpush1.bf16.msra.mxu0 0
    %170 = vmatprep.subr.bf16.mxu0 0
    %171 = vmatpush1.bf16.msra.mxu0 0
    %172 = vmatprep.subr.bf16.mxu0 0
    %173 = vmatpush1.bf16.msra.mxu0 0
    %174 = vmatprep.subr.bf16.mxu0 0
    %175 = vmatpush1.bf16.msra.mxu0 0
    %176 = vmatprep.subr.bf16.mxu0 0
    %177 = vmatpush1.bf16.msra.mxu0 0
    %178 = vmatprep.subr.bf16.mxu0 0
    %179 = vmatpush1.bf16.msra.mxu0 0
    %180 = vmatprep.subr.bf16.mxu0 0
    %181 = vmatpush1.bf16.msra.mxu0 0
    %182 = vmatprep.subr.bf16.mxu0 0
    %183 = vmatpush1.bf16.msra.mxu0 0
    %184 = vmatprep.mubr.bf16.mxu0 0
    %185 = vmatmul.mubr.bf16.gmra.mrb[0].mxu0 %v43
    %v186 = vpop.f32.mrb[0].mxu0
    %v187 = vadd.f32 %v65, %v186
    %v188 = vpop.f32.mrb[0].mxu0
    %v189 = vadd.f32 %v69, %v188
    %v190 = vpop.f32.mrb[0].mxu0
    %v191 = vpop.f32.mrb[0].mxu0
    %192 = vdwg.mxu0
    %v193 = vmax.f32 %v187, 0.0
    %v194 = vxor.u32 %v189, 2147483648
    %v195 = vmul.f32 %v194, 1.442695
    %v196 = vpow.pop %v195
    %v197 = vadd.f32 %v196, 1.0
    %v198 = vrcp.pop %v197
    %v199 = vmul.f32 1.0, %v198
    %v200 = vsub.f32 %v193, %v42
    %v201 = vmul.f32 %v199, %v200
    %v202 = vadd.f32 %v42, %v201
    %203 = vst [vmem:[#allocation7] sm:$0xff] %v202
    // Predicated region
    $region22: #{tpu_custom_call.1} parent=1 // pred_check
      _
    $region23: #{tpu_custom_call.1} parent=1 // pred_check_branch
      %205 = sbr.rel (0) target = $region25
    $region24: #{tpu_custom_call.1} parent=1 // pred_region
      %s207 = ssub.s32 128, 128
      %208 = vsyncadd [#allocation4], %s207
      %s210 = sshll.u32 [#allocation7], 4
      %s211 = int_to_ptr.vmem [resolvable:$true] %s210
      %213 = dma.vmem_to_hbm [thread:$0]  %s211, 128, %s3, [#allocation4]
    $region25: #{tpu_custom_call.1} parent=1 // pred_fallthru
      _
    // Predicated region
    $region26: #{tpu_custom_call.1} parent=1 // pred_check
      _
    $region27: #{tpu_custom_call.1} parent=1 // pred_check_branch
      %215 = sbr.rel (0) target = $region29
    $region28: #{tpu_custom_call.1} parent=1 // pred_region
      %216 = dma.done [#allocation4], 128
    $region29: #{tpu_custom_call.1} parent=1 // pred_fallthru
      _
    %217 = vsyncpa [#allocation3], 1
    %218 = vsyncpa [#allocation6], 1
    %219 = vsyncpa [#allocation4], 1

</llo_original>
